<compile_context>
chip_gen: v5e
topology: v5e:2x2
jax: 0.10.0
libtpu: 0.0.40
codegen_flags: <defaults>
</compile_context>

<pallas_src>
import math
import jax
import jax.numpy as jnp
from jax import lax
from jax.experimental import pallas as pl
from jax.experimental.pallas import tpu as pltpu

_SQRT3 = math.sqrt(3.0)
_SQRT5 = math.sqrt(5.0)
_SQRT15 = math.sqrt(15.0)
_EPS = 1e-12  # matches torch.nn.functional.normalize default eps

_LANE = 128            # TPU lane width; edges map onto the lane axis
_BLOCK_SUBLANES = 512  # up to 512*128 = 65536 edges per grid step (~3 MiB in+out, double-buffered)


def _round_up(n: int, m: int) -> int:
    return ((n + m - 1) // m) * m


def _sh_kernel(vec_ref, out_ref):
    """vec_ref: (3, S, 128) f32 edge vectors (channel-major, sublane-dense).
       out_ref: (9, S, 128) f32 spherical harmonics (lmax=2, e3nn 'component' norm, normalize=True)."""
    x = vec_ref[0]                        # (S, 128)
    y = vec_ref[1]
    z = vec_ref[2]

    # normalize=True : v / max(||v||, eps).  rsqrt(max(n2, eps^2)) == 1/max(||v||, eps)
    # (sqrt is monotone), so torch.nn.functional.normalize semantics are preserved while the
    # rsqrt runs on the EUP (otherwise-idle bundle slot).
    n2 = x * x + y * y + z * z
    inv = lax.rsqrt(jnp.maximum(n2, _EPS * _EPS))
    x = x * inv
    y = y * inv
    z = z * inv

    # l = 0
    out_ref[0] = jnp.ones_like(x)
    # l = 1 (component normalization: sqrt(3) * (x, y, z))
    out_ref[1] = _SQRT3 * x
    out_ref[2] = _SQRT3 * y
    out_ref[3] = _SQRT3 * z
    # l = 2
    out_ref[4] = _SQRT15 * x * z
    out_ref[5] = _SQRT15 * x * y
    out_ref[6] = _SQRT5 * (y * y - 0.5 * (x * x + z * z))
    out_ref[7] = _SQRT15 * y * z
    out_ref[8] = (_SQRT15 / 2.0) * (z * z - x * x)


def spherical_harmonics_edge_attrs(pos: jnp.ndarray, edge_index: jnp.ndarray,
                                   block_sublanes: int = _BLOCK_SUBLANES):
    """Forward pass of SphericalHarmonicEdgeAttrs.

    Args:
      pos:        (N, 3) float32 atomic positions.
      edge_index: (2, E) int32, rows = (source, target) as in nequip.

    Returns:
      dict with 'edge_vectors' (E, 3) and 'edge_attrs' (E, 9).
    """
    pos = pos.astype(jnp.float32)
    E = edge_index.shape[1]

    # Tiling: edges -> (sublane_rows, 128 lanes).  Block carries S_BLK sublane rows.
    s_needed = -(-E // _LANE)                              # ceil(E / 128)
    S_BLK = min(block_sublanes, _round_up(max(s_needed, 1), 8))   # multiple of 8 sublanes
    S_total = _round_up(max(s_needed, 1), S_BLK)
    E_pad = S_total * _LANE

    # Build channel-major edge vectors in a single gather-subtract pass (no transpose of a
    # narrow-last-dim array, no zeros + dynamic_update_slice).  Padded edges use index 0
    # (their garbage output is sliced away below).
    idx_pad = jnp.pad(edge_index.astype(jnp.int32), ((0, 0), (0, E_pad - E)))
    posT = pos.T                                           # (3, N)
    vec_t = posT[:, idx_pad[1]] - posT[:, idx_pad[0]]      # (3, E_pad)  = target - source
    vec_3d = vec_t.reshape(3, S_total, _LANE)

    grid = (S_total // S_BLK,)

    sh_3d = pl.pallas_call(
        _sh_kernel,
        out_shape=jax.ShapeDtypeStruct((9, S_total, _LANE), jnp.float32),
        grid_spec=pltpu.PrefetchScalarGridSpec(
            num_scalar_prefetch=0,
            grid=grid,
            in_specs=[pl.BlockSpec((3, S_BLK, _LANE), lambda i: (0, i, 0))],
            out_specs=pl.BlockSpec((9, S_BLK, _LANE), lambda i: (0, i, 0)),
        ),
        compiler_params=pltpu.CompilerParams(
            dimension_semantics=("parallel",),   # shards grid steps across TCs on v7x
        ),
    )(vec_3d)

    # Back to the PyTorch/e3nn (E, 9) convention.
    # TODO(synk): if the consumer is another Pallas kernel (radial / tensor product), keep the
    # channel-major (9, E_pad) layout and skip this transpose to save an HBM pass.
    edge_sh = sh_3d.reshape(9, E_pad)[:, :E].T             # (E, 9)
    edge_vec = vec_t[:, :E].T                              # (E, 3)
    return {"edge_vectors": edge_vec, "edge_attrs": edge_sh}


def _reference_sh(edge_vec):
    """Pure-JAX reference of e3nn component-normalized SH (lmax=2), normalize=True."""
    n = jnp.maximum(jnp.linalg.norm(edge_vec, axis=-1, keepdims=True), _EPS)
    v = edge_vec / n
    x, y, z = v[:, 0], v[:, 1], v[:, 2]
    return jnp.stack(
        [
            jnp.ones_like(x),
            _SQRT3 * x, _SQRT3 * y, _SQRT3 * z,
            _SQRT15 * x * z, _SQRT15 * x * y,
            _SQRT5 * (y * y - 0.5 * (x * x + z * z)),
            _SQRT15 * y * z,
            (_SQRT15 / 2.0) * (z * z - x * x),
        ],
        axis=-1,
    )


if __name__ == "__main__":
    key = jax.random.PRNGKey(0)
    k_pos, k_src, k_dst = jax.random.split(key, 3)

    N = 10   # atoms
    E = 16   # edges

    pos = jax.random.normal(k_pos, (N, 3), dtype=jnp.float32) * 2.0
    src = jax.random.randint(k_src, (E,), 0, N, dtype=jnp.int32)
    dst = jax.random.randint(k_dst, (E,), 0, N, dtype=jnp.int32)
    edge_index = jnp.stack([src, dst], axis=0)                # (2, E)

    out = spherical_harmonics_edge_attrs(pos, edge_index)
    edge_sh = jax.block_until_ready(out["edge_attrs"])

    assert edge_sh.shape == (E, 9) and edge_sh.dtype == jnp.float32
    ref_vec = pos[edge_index[1]] - pos[edge_index[0]]
    assert jnp.allclose(out["edge_vectors"], ref_vec, atol=1e-6, rtol=1e-6)
    ref = _reference_sh(ref_vec)
    assert jnp.allclose(edge_sh, ref, atol=1e-5, rtol=1e-5)

    print("KERNEL_OK")
</pallas_src>

<mosaic_0001>
module attributes {stable_mosaic.version = 11 : i64} {
  func.func @_sh_kernel(%arg0: i32, %arg1: memref<3x8x128xf32, #tpu.memory_space<vmem>>, %arg2: memref<9x8x128xf32, #tpu.memory_space<vmem>>) attributes {dimension_semantics = [#tpu.dimension_semantics<parallel>], iteration_bounds = array<i64: 1>, scalar_prefetch = 0 : i64, scratch_operands = 0 : i64, tpu.core_type = #tpu.core_type<tc>, window_params = [{transform_indices = @transform_0, window_bounds = array<i64: 3, 8, 128>}, {transform_indices = @transform_1, window_bounds = array<i64: 9, 8, 128>}]} {
    %c0 = arith.constant 0 : index
    %c0_0 = arith.constant 0 : index
    %c0_1 = arith.constant 0 : index
    %0 = vector.load %arg1[%c0, %c0_0, %c0_1] : memref<3x8x128xf32, #tpu.memory_space<vmem>>, vector<1x8x128xf32>
    %1 = vector.shape_cast %0 : vector<1x8x128xf32> to vector<8x128xf32>
    %c1 = arith.constant 1 : index
    %c0_2 = arith.constant 0 : index
    %c0_3 = arith.constant 0 : index
    %2 = vector.load %arg1[%c1, %c0_2, %c0_3] : memref<3x8x128xf32, #tpu.memory_space<vmem>>, vector<1x8x128xf32>
    %3 = vector.shape_cast %2 : vector<1x8x128xf32> to vector<8x128xf32>
    %c2 = arith.constant 2 : index
    %c0_4 = arith.constant 0 : index
    %c0_5 = arith.constant 0 : index
    %4 = vector.load %arg1[%c2, %c0_4, %c0_5] : memref<3x8x128xf32, #tpu.memory_space<vmem>>, vector<1x8x128xf32>
    %5 = vector.shape_cast %4 : vector<1x8x128xf32> to vector<8x128xf32>
    %6 = arith.mulf %1, %1 : vector<8x128xf32>
    %7 = arith.mulf %3, %3 : vector<8x128xf32>
    %8 = arith.addf %6, %7 : vector<8x128xf32>
    %9 = arith.mulf %5, %5 : vector<8x128xf32>
    %10 = arith.addf %8, %9 : vector<8x128xf32>
    %cst = arith.constant 1.000000e-24 : f32
    %11 = vector.broadcast %cst : f32 to vector<8x128xf32>
    %12 = arith.maximumf %10, %11 : vector<8x128xf32>
    %13 = math.rsqrt %12 : vector<8x128xf32>
    %14 = arith.mulf %1, %13 : vector<8x128xf32>
    %15 = arith.mulf %3, %13 : vector<8x128xf32>
    %16 = arith.mulf %5, %13 : vector<8x128xf32>
    %cst_6 = arith.constant 1.000000e+00 : f32
    %17 = vector.broadcast %cst_6 : f32 to vector<8x128xf32>
    %c0_7 = arith.constant 0 : index
    %c0_8 = arith.constant 0 : index
    %c0_9 = arith.constant 0 : index
    %18 = vector.load %arg2[%c0_7, %c0_8, %c0_9] : memref<9x8x128xf32, #tpu.memory_space<vmem>>, vector<1x8x128xf32>
    %19 = vector.shape_cast %18 : vector<1x8x128xf32> to vector<8x128xf32>
    %20 = vector.shape_cast %17 : vector<8x128xf32> to vector<1x8x128xf32>
    tpu.vector_store %arg2[%c0_7, %c0_8, %c0_9], %20 {strides = array<i32>} : memref<9x8x128xf32, #tpu.memory_space<vmem>>, vector<1x8x128xf32>,
    %cst_10 = arith.constant 1.73205078 : f32
    %21 = vector.broadcast %cst_10 : f32 to vector<8x128xf32>
    %22 = arith.mulf %21, %14 : vector<8x128xf32>
    %c1_11 = arith.constant 1 : index
    %c0_12 = arith.constant 0 : index
    %c0_13 = arith.constant 0 : index
    %23 = vector.load %arg2[%c1_11, %c0_12, %c0_13] : memref<9x8x128xf32, #tpu.memory_space<vmem>>, vector<1x8x128xf32>
    %24 = vector.shape_cast %23 : vector<1x8x128xf32> to vector<8x128xf32>
    %25 = vector.shape_cast %22 : vector<8x128xf32> to vector<1x8x128xf32>
    tpu.vector_store %arg2[%c1_11, %c0_12, %c0_13], %25 {strides = array<i32>} : memref<9x8x128xf32, #tpu.memory_space<vmem>>, vector<1x8x128xf32>,
    %cst_14 = arith.constant 1.73205078 : f32
    %26 = vector.broadcast %cst_14 : f32 to vector<8x128xf32>
    %27 = arith.mulf %26, %15 : vector<8x128xf32>
    %c2_15 = arith.constant 2 : index
    %c0_16 = arith.constant 0 : index
    %c0_17 = arith.constant 0 : index
    %28 = vector.load %arg2[%c2_15, %c0_16, %c0_17] : memref<9x8x128xf32, #tpu.memory_space<vmem>>, vector<1x8x128xf32>
    %29 = vector.shape_cast %28 : vector<1x8x128xf32> to vector<8x128xf32>
    %30 = vector.shape_cast %27 : vector<8x128xf32> to vector<1x8x128xf32>
    tpu.vector_store %arg2[%c2_15, %c0_16, %c0_17], %30 {strides = array<i32>} : memref<9x8x128xf32, #tpu.memory_space<vmem>>, vector<1x8x128xf32>,
    %cst_18 = arith.constant 1.73205078 : f32
    %31 = vector.broadcast %cst_18 : f32 to vector<8x128xf32>
    %32 = arith.mulf %31, %16 : vector<8x128xf32>
    %c3 = arith.constant 3 : index
    %c0_19 = arith.constant 0 : index
    %c0_20 = arith.constant 0 : index
    %33 = vector.load %arg2[%c3, %c0_19, %c0_20] : memref<9x8x128xf32, #tpu.memory_space<vmem>>, vector<1x8x128xf32>
    %34 = vector.shape_cast %33 : vector<1x8x128xf32> to vector<8x128xf32>
    %35 = vector.shape_cast %32 : vector<8x128xf32> to vector<1x8x128xf32>
    tpu.vector_store %arg2[%c3, %c0_19, %c0_20], %35 {strides = array<i32>} : memref<9x8x128xf32, #tpu.memory_space<vmem>>, vector<1x8x128xf32>,
    %cst_21 = arith.constant 3.87298346 : f32
    %36 = vector.broadcast %cst_21 : f32 to vector<8x128xf32>
    %37 = arith.mulf %36, %14 : vector<8x128xf32>
    %38 = arith.mulf %37, %16 : vector<8x128xf32>
    %c4 = arith.constant 4 : index
    %c0_22 = arith.constant 0 : index
    %c0_23 = arith.constant 0 : index
    %39 = vector.load %arg2[%c4, %c0_22, %c0_23] : memref<9x8x128xf32, #tpu.memory_space<vmem>>, vector<1x8x128xf32>
    %40 = vector.shape_cast %39 : vector<1x8x128xf32> to vector<8x128xf32>
    %41 = vector.shape_cast %38 : vector<8x128xf32> to vector<1x8x128xf32>
    tpu.vector_store %arg2[%c4, %c0_22, %c0_23], %41 {strides = array<i32>} : memref<9x8x128xf32, #tpu.memory_space<vmem>>, vector<1x8x128xf32>,
    %cst_24 = arith.constant 3.87298346 : f32
    %42 = vector.broadcast %cst_24 : f32 to vector<8x128xf32>
    %43 = arith.mulf %42, %14 : vector<8x128xf32>
    %44 = arith.mulf %43, %15 : vector<8x128xf32>
    %c5 = arith.constant 5 : index
    %c0_25 = arith.constant 0 : index
    %c0_26 = arith.constant 0 : index
    %45 = vector.load %arg2[%c5, %c0_25, %c0_26] : memref<9x8x128xf32, #tpu.memory_space<vmem>>, vector<1x8x128xf32>
    %46 = vector.shape_cast %45 : vector<1x8x128xf32> to vector<8x128xf32>
    %47 = vector.shape_cast %44 : vector<8x128xf32> to vector<1x8x128xf32>
    tpu.vector_store %arg2[%c5, %c0_25, %c0_26], %47 {strides = array<i32>} : memref<9x8x128xf32, #tpu.memory_space<vmem>>, vector<1x8x128xf32>,
    %48 = arith.mulf %15, %15 : vector<8x128xf32>
    %49 = arith.mulf %14, %14 : vector<8x128xf32>
    %50 = arith.mulf %16, %16 : vector<8x128xf32>
    %51 = arith.addf %49, %50 : vector<8x128xf32>
    %cst_27 = arith.constant 5.000000e-01 : f32
    %52 = vector.broadcast %cst_27 : f32 to vector<8x128xf32>
    %53 = arith.mulf %52, %51 : vector<8x128xf32>
    %54 = arith.subf %48, %53 : vector<8x128xf32>
    %cst_28 = arith.constant 2.23606801 : f32
    %55 = vector.broadcast %cst_28 : f32 to vector<8x128xf32>
    %56 = arith.mulf %55, %54 : vector<8x128xf32>
    %c6 = arith.constant 6 : index
    %c0_29 = arith.constant 0 : index
    %c0_30 = arith.constant 0 : index
    %57 = vector.load %arg2[%c6, %c0_29, %c0_30] : memref<9x8x128xf32, #tpu.memory_space<vmem>>, vector<1x8x128xf32>
    %58 = vector.shape_cast %57 : vector<1x8x128xf32> to vector<8x128xf32>
    %59 = vector.shape_cast %56 : vector<8x128xf32> to vector<1x8x128xf32>
    tpu.vector_store %arg2[%c6, %c0_29, %c0_30], %59 {strides = array<i32>} : memref<9x8x128xf32, #tpu.memory_space<vmem>>, vector<1x8x128xf32>,
    %cst_31 = arith.constant 3.87298346 : f32
    %60 = vector.broadcast %cst_31 : f32 to vector<8x128xf32>
    %61 = arith.mulf %60, %15 : vector<8x128xf32>
    %62 = arith.mulf %61, %16 : vector<8x128xf32>
    %c7 = arith.constant 7 : index
    %c0_32 = arith.constant 0 : index
    %c0_33 = arith.constant 0 : index
    %63 = vector.load %arg2[%c7, %c0_32, %c0_33] : memref<9x8x128xf32, #tpu.memory_space<vmem>>, vector<1x8x128xf32>
    %64 = vector.shape_cast %63 : vector<1x8x128xf32> to vector<8x128xf32>
    %65 = vector.shape_cast %62 : vector<8x128xf32> to vector<1x8x128xf32>
    tpu.vector_store %arg2[%c7, %c0_32, %c0_33], %65 {strides = array<i32>} : memref<9x8x128xf32, #tpu.memory_space<vmem>>, vector<1x8x128xf32>,
    %66 = arith.mulf %16, %16 : vector<8x128xf32>
    %67 = arith.mulf %14, %14 : vector<8x128xf32>
    %68 = arith.subf %66, %67 : vector<8x128xf32>
    %cst_34 = arith.constant 1.93649173 : f32
    %69 = vector.broadcast %cst_34 : f32 to vector<8x128xf32>
    %70 = arith.mulf %69, %68 : vector<8x128xf32>
    %c8 = arith.constant 8 : index
    %c0_35 = arith.constant 0 : index
    %c0_36 = arith.constant 0 : index
    %71 = vector.load %arg2[%c8, %c0_35, %c0_36] : memref<9x8x128xf32, #tpu.memory_space<vmem>>, vector<1x8x128xf32>
    %72 = vector.shape_cast %71 : vector<1x8x128xf32> to vector<8x128xf32>
    %73 = vector.shape_cast %70 : vector<8x128xf32> to vector<1x8x128xf32>
    tpu.vector_store %arg2[%c8, %c0_35, %c0_36], %73 {strides = array<i32>} : memref<9x8x128xf32, #tpu.memory_space<vmem>>, vector<1x8x128xf32>,
    return
  }
  func.func @transform_0(%arg0: i32) -> (i32, i32, i32) {
    %c0_i32 = arith.constant 0 : i32
    %c0_i32_0 = arith.constant 0 : i32
    %c0_i32_1 = arith.constant 0 : i32
    return %c0_i32, %arg0, %c0_i32_0 : i32, i32, i32
  }
  func.func @transform_1(%arg0: i32) -> (i32, i32, i32) {
    %c0_i32 = arith.constant 0 : i32
    %c0_i32_0 = arith.constant 0 : i32
    %c0_i32_1 = arith.constant 0 : i32
    return %c0_i32, %arg0, %c0_i32_0 : i32, i32, i32
  }
}

</mosaic_0001>

<llo_original>
// kernel: tpu_custom_call.1
$region0: #{tpu_custom_call.1}
  #allocation0 [shape = 'u32[]', space=smem, size = 0x4, offset = 0x4, fixed_abs, tag = 'smem constant byte address 0x4 - core index']
  #allocation1 [shape = 'u32[72,128]{1,0:T(1,128)}', space=vmem, size = 0x9000, scoped, tag = 'internal scratch']
  %s0 = inlined_call_operand.hbm [shape: f32[3,8,128], index: 0, kind: input, shape index: {}]
  %s1 = inlined_call_operand.hbm [shape: f32[9,8,128], index: 1, kind: output, shape index: {}]
  %s2 = sld [smem:[#allocation0]]
  $region18: #{tpu_custom_call.1} parent=0
    _
  %s4 = ssub.s32 1, %s2
  %s5 = scalar_select 0, %s4, %s2
  $region1: #{tpu_custom_call.1} parent=0
    #allocation2 [shape = 'u8[12288]{0}', space=vmem, size = 0x3000, scoped, tag = 'input window, operand 0, single buffered']
    #allocation3 [shape = 's32[1]{0}', space=sflag, size = 0x4, scoped, tag = 'scoped memory for tpu_custom_call.1']
    #allocation4 [shape = 's32[1]{0}', space=sflag, size = 0x4, scoped, tag = 'scoped memory for tpu_custom_call.1']
    #allocation5 [shape = 'u8[36864]{0}', space=vmem, size = 0x9000, scoped, tag = 'output window, operand 0, single buffered']
    %6 = vsyncpa [#allocation3], 0
    %7 = vsyncpa [#allocation4], 0
    // Predicated region
    $region2: #{tpu_custom_call.1} parent=1 // pred_check
      _
    $region3: #{tpu_custom_call.1} parent=1 // pred_check_branch
      %9 = sbr.rel (0) target = $region5
    $region4: #{tpu_custom_call.1} parent=1 // pred_region
      %11 = vsyncadd [#allocation3], 0
      %s12 = sshll.u32 %s0, 4
      %s13 = int_to_ptr.hbm [resolvable:$true] %s12
      %s14 = sshll.u32 [#allocation2], 4
      %s15 = int_to_ptr.vmem [resolvable:$true] %s14
      %20 = dma.hbm_to_vmem [thread:$0]  %s13, 384, %s15, [#allocation3], 128, 128, 8
    $region5: #{tpu_custom_call.1} parent=1 // pred_fallthru
      _
    // Predicated region
    $region6: #{tpu_custom_call.1} parent=1 // pred_check
      _
    $region7: #{tpu_custom_call.1} parent=1 // pred_check_branch
      %22 = sbr.rel (0) target = $region9
    $region8: #{tpu_custom_call.1} parent=1 // pred_region
      %24 = dma.done [#allocation3], 384
    $region9: #{tpu_custom_call.1} parent=1 // pred_fallthru
      _
    %v25 = vld [vmem:[#allocation2] sm:$0xff]
    %s26 = scalar_lea.vmem [#allocation2], 8
    %v27 = vld [vmem:[%s26] sm:$0xff]
    %s28 = scalar_lea.vmem [#allocation2], 16
    %v29 = vld [vmem:[%s28] sm:$0xff]
    %v30 = vmul.f32 %v25, %v25
    %v31 = vmul.f32 %v27, %v27
    %v32 = vadd.f32 %v30, %v31
    %v33 = vmul.f32 %v29, %v29
    %v34 = vadd.f32 %v32, %v33
    %v35 = vmax.f32 %v34, 1e-24
    %v36 = vrsqrt.pop %v35
    %v37 = vmul.f32 %v36, %v35
    %v38 = vmul.f32 %v37, %v36
    %v39 = vmul.f32 0.5, %v38
    %v40 = vsub.f32 1.5, %v39
    %v41 = vmul.f32 %v36, %v40
    %vm42 = vweird.f32 %v35
    %vm43 = vweird.f32 %v36
    %vm44 = vmor %vm42, %vm43
    %v45 = vsel %vm44, %v36, %v41
    %v46 = vmul.f32 %v25, %v45
    %v47 = vmul.f32 %v27, %v45
    %v48 = vmul.f32 %v29, %v45
    %49 = vst [vmem:[#allocation5] sm:$0xff] 1.0
    %v50 = vmul.f32 %v46, 1.7320508
    %s51 = scalar_lea.vmem [#allocation5], 8
    %52 = vst [vmem:[%s51] sm:$0xff] %v50
    %v53 = vmul.f32 %v47, 1.7320508
    %s54 = scalar_lea.vmem [#allocation5], 16
    %55 = vst [vmem:[%s54] sm:$0xff] %v53
    %v56 = vmul.f32 %v48, 1.7320508
    %s57 = scalar_lea.vmem [#allocation5], 24
    %58 = vst [vmem:[%s57] sm:$0xff] %v56
    %v59 = vmul.f32 %v46, 3.8729835
    %v60 = vmul.f32 %v59, %v48
    %s61 = scalar_lea.vmem [#allocation5], 32
    %62 = vst [vmem:[%s61] sm:$0xff] %v60
    %v63 = vmul.f32 %v59, %v47
    %s64 = scalar_lea.vmem [#allocation5], 40
    %65 = vst [vmem:[%s64] sm:$0xff] %v63
    %v66 = vmul.f32 %v47, %v47
    %v67 = vmul.f32 %v46, %v46
    %v68 = vmul.f32 %v48, %v48
    %v69 = vadd.f32 %v67, %v68
    %v70 = vmul.f32 %v69, 0.5
    %v71 = vsub.f32 %v66, %v70
    %v72 = vmul.f32 %v71, 2.236068
    %s73 = scalar_lea.vmem [#allocation5], 48
    %74 = vst [vmem:[%s73] sm:$0xff] %v72
    %v75 = vmul.f32 %v47, 3.8729835
    %v76 = vmul.f32 %v75, %v48
    %s77 = scalar_lea.vmem [#allocation5], 56
    %78 = vst [vmem:[%s77] sm:$0xff] %v76
    %v79 = vsub.f32 %v68, %v67
    %v80 = vmul.f32 %v79, 1.9364917
    %s81 = scalar_lea.vmem [#allocation5], 64
    %82 = vst [vmem:[%s81] sm:$0xff] %v80
    // Predicated region
    $region10: #{tpu_custom_call.1} parent=1 // pred_check
      _
    $region11: #{tpu_custom_call.1} parent=1 // pred_check_branch
      %84 = sbr.rel (0) target = $region13
    $region12: #{tpu_custom_call.1} parent=1 // pred_region
      %86 = vsyncadd [#allocation4], 0
      %s87 = sshll.u32 [#allocation5], 4
      %s88 = int_to_ptr.vmem [resolvable:$true] %s87
      %s89 = sshll.u32 %s1, 4
      %s90 = int_to_ptr.hbm [resolvable:$true] %s89
      %95 = dma.vmem_to_hbm [thread:$0]  %s88, 1152, %s90, [#allocation4], 128, 128, 8
    $region13: #{tpu_custom_call.1} parent=1 // pred_fallthru
      _
    // Predicated region
    $region14: #{tpu_custom_call.1} parent=1 // pred_check
      _
    $region15: #{tpu_custom_call.1} parent=1 // pred_check_branch
      %97 = sbr.rel (0) target = $region17
    $region16: #{tpu_custom_call.1} parent=1 // pred_region
      %99 = dma.done [#allocation4], 1152
    $region17: #{tpu_custom_call.1} parent=1 // pred_fallthru
      _
    %100 = vsyncpa [#allocation3], 1
    %101 = vsyncpa [#allocation4], 1

</llo_original>
